<compile_context>
chip_gen: v7x
topology: tpu7x:2x2x1
jax: 0.10.0
libtpu: 0.0.40
codegen_flags: <defaults>
</compile_context>

<pallas_src>
import functools

import numpy as np
import jax
import jax.numpy as jnp
from jax import lax
from jax.experimental import pallas as pl
from jax.experimental.pallas import tpu as pltpu

_LANES = 128          # lane-dense output width
_MAX_BLOCK_ROWS = 512 # 512 x 128 int32 = 256 KiB per output tile (x2 double-buffered)


def _c32(v):
    """Python int -> wrapped int32 constant (for hash multipliers > 2^31)."""
    v &= 0xFFFFFFFF
    if v >= 1 << 31:
        v -= 1 << 32
    return jnp.int32(v)


def _srl(x, n):
    """Logical right shift on int32."""
    return lax.shift_right_logical(x, jnp.int32(n))


def _sampler_kernel(seed_ref, neg_items_ref, *, num_items, block_rows):
    """Uniform negative sampling for one (block_rows, 128) output tile.

    seed_ref      : SMEM (1,) int32   PRNG seed
    neg_items_ref : VMEM (block_rows, 128) int32  sampled ids in [1, num_items]
    """
    tile = pl.program_id(0)
    base = tile * jnp.int32(block_rows * _LANES)

    # Global element counter for this tile (distinct per element and per tile,
    # hence distinct per TensorCore when the grid is sharded).
    row = lax.broadcasted_iota(jnp.int32, (block_rows, _LANES), 0)
    col = lax.broadcasted_iota(jnp.int32, (block_rows, _LANES), 1)
    ctr = base + row * jnp.int32(_LANES) + col

    # Counter-based hash (splitmix32-style finalizer), seed mixed in up front.
    x = ctr + seed_ref[0] * _c32(0x9E3779B1)
    x = x ^ _srl(x, 16)
    x = x * _c32(0x7FEB352D)
    x = x ^ _srl(x, 15)
    x = x * _c32(0x846CA68B)
    x = x ^ _srl(x, 16)

    # Top 24 bits -> exact float32 fraction in [0, 1) -> id in [1, num_items]
    # (matches torch.randint(1, num_items + 1)).
    # TODO(synk): for catalogs > ~16.7M items use a 32-bit multiply-high path.
    val24 = _srl(x, 8)
    scale = jnp.float32(float(num_items) / float(1 << 24))
    idx = (val24.astype(jnp.float32) * scale).astype(jnp.int32) + 1
    neg_items_ref[...] = jnp.minimum(idx, jnp.int32(num_items))  # guard f32 top edge


def _sample_uniform_ids(total, num_items, seed):
    """Draw `total` uniform ids in [1, num_items] via a lane-dense tiled kernel."""
    rows = pl.cdiv(max(total, 1), _LANES)
    block_rows = min(_MAX_BLOCK_ROWS, pl.cdiv(rows, 8) * 8)   # multiple of 8 sublanes
    rows_padded = pl.cdiv(rows, block_rows) * block_rows
    grid_len = rows_padded // block_rows

    seed_arr = jnp.asarray([seed], jnp.int32)
    kernel = functools.partial(
        _sampler_kernel, num_items=int(num_items), block_rows=block_rows)

    out = pl.pallas_call(
        kernel,
        out_shape=jax.ShapeDtypeStruct((rows_padded, _LANES), jnp.int32),
        grid=(grid_len,),
        in_specs=[pl.BlockSpec(memory_space=pltpu.MemorySpace.SMEM)],  # seed only
        out_specs=pl.BlockSpec((block_rows, _LANES), lambda i: (i, 0)),
        compiler_params=pltpu.CompilerParams(
            dimension_semantics=("parallel",)),
        cost_estimate=pl.CostEstimate(
            flops=12 * rows_padded * _LANES,
            transcendentals=0,
            bytes_accessed=4 * rows_padded * _LANES),
    )(seed_arr)
    return out.reshape(-1)[:total]


class PallasSampler:
    """JAX/Pallas port of the PyTorch `Sampler` module (uniform sampler)."""

    def __init__(self, num_items, scorer_fn=None):
        self.num_items = num_items - 1   # same convention as the torch module
        self.scorer = scorer_fn

    def update(self, item_embs, max_iter=30):
        # Abstract in the reference module (body is `pass`); nothing to do for
        # the uniform sampler.
        pass

    def compute_item_p(self, query, pos_items):
        # Uniform sampler: constant log-prob -> zeros with the items' shape.
        return jnp.zeros_like(jnp.asarray(pos_items))

    def forward(self, query, num_neg, pos_items=None, *, seed=0):
        shape = query.shape[:-1]
        num_queries = int(np.prod(shape)) if len(shape) > 0 else 1
        total = num_queries * num_neg

        neg_flat = _sample_uniform_ids(total, self.num_items, seed)
        neg_items = neg_flat.reshape(*shape, num_neg)

        # Constant-zero probabilities are emitted in the wrapper (not stored by
        # the kernel) to avoid doubling HBM writeback for pure constants.
        neg_prob = jnp.zeros_like(neg_items)
        if pos_items is not None:
            pos_prob = jnp.zeros_like(jnp.asarray(pos_items))
            return pos_prob, neg_items, neg_prob
        return neg_items, neg_prob

    __call__ = forward


if __name__ == "__main__":
    key = jax.random.PRNGKey(0)
    k_q, k_p = jax.random.split(key)

    B, D = 8, 32            # batch of queries, hidden dim
    NUM_ITEMS = 101         # -> sampler draws ids in [1, 100]
    NUM_NEG = 16

    query = jax.random.normal(k_q, (B, D), dtype=jnp.float32)
    pos_items = jax.random.randint(k_p, (B,), 1, NUM_ITEMS, dtype=jnp.int32)

    sampler = PallasSampler(NUM_ITEMS)
    pos_prob, neg_items, neg_prob = sampler(query, NUM_NEG, pos_items, seed=0)
    jax.block_until_ready((pos_prob, neg_items, neg_prob))

    # Sanity checks on semantics.
    assert pos_prob.shape == pos_items.shape
    assert neg_items.shape == (B, NUM_NEG)
    assert neg_prob.shape == (B, NUM_NEG)
    assert bool(jnp.all(pos_prob == 0))
    assert bool(jnp.all(neg_prob == 0))
    assert bool(jnp.all(neg_items >= 1)) and bool(jnp.all(neg_items <= NUM_ITEMS - 1))

    print("KERNEL_OK")
</pallas_src>

<mosaic_0001>
module attributes {stable_mosaic.version = 11 : i64} {
  func.func @_sampler_kernel(%arg0: i32, %arg1: memref<1xi32, #tpu.memory_space<smem>>, %arg2: memref<8x128xi32, #tpu.memory_space<vmem>>) attributes {dimension_semantics = [#tpu.dimension_semantics<parallel>], iteration_bounds = array<i64: 1>, scalar_prefetch = 0 : i64, scratch_operands = 0 : i64, tpu.core_type = #tpu.core_type<tc>, window_params = [{transform_indices = @transform_0, window_bounds = array<i64: 1>}, {transform_indices = @transform_1, window_bounds = array<i64: 8, 128>}]} {
    %c1024_i32 = arith.constant 1024 : i32
    %0 = arith.muli %arg0, %c1024_i32 : i32
    %1 = tpu.iota {dimensions = array<i32: 0>} : vector<8x128xi32>
    %2 = tpu.iota {dimensions = array<i32: 1>} : vector<8x128xi32>
    %c128_i32 = arith.constant 128 : i32
    %3 = vector.broadcast %c128_i32 : i32 to vector<8x128xi32>
    %4 = arith.muli %1, %3 : vector<8x128xi32>
    %5 = vector.broadcast %0 : i32 to vector<8x128xi32>
    %6 = arith.addi %5, %4 : vector<8x128xi32>
    %7 = arith.addi %6, %2 : vector<8x128xi32>
    %c0 = arith.constant 0 : index
    %8 = memref.load %arg1[%c0] : memref<1xi32, #tpu.memory_space<smem>>
    %c-1640531535_i32 = arith.constant -1640531535 : i32
    %9 = arith.muli %8, %c-1640531535_i32 : i32
    %10 = vector.broadcast %9 : i32 to vector<8x128xi32>
    %11 = arith.addi %7, %10 : vector<8x128xi32>
    %c16_i32 = arith.constant 16 : i32
    %12 = vector.broadcast %c16_i32 : i32 to vector<8x128xi32>
    %13 = arith.shrui %11, %12 : vector<8x128xi32>
    %14 = arith.xori %11, %13 : vector<8x128xi32>
    %c2146121005_i32 = arith.constant 2146121005 : i32
    %15 = vector.broadcast %c2146121005_i32 : i32 to vector<8x128xi32>
    %16 = arith.muli %14, %15 : vector<8x128xi32>
    %c15_i32 = arith.constant 15 : i32
    %17 = vector.broadcast %c15_i32 : i32 to vector<8x128xi32>
    %18 = arith.shrui %16, %17 : vector<8x128xi32>
    %19 = arith.xori %16, %18 : vector<8x128xi32>
    %c-2073254261_i32 = arith.constant -2073254261 : i32
    %20 = vector.broadcast %c-2073254261_i32 : i32 to vector<8x128xi32>
    %21 = arith.muli %19, %20 : vector<8x128xi32>
    %c16_i32_0 = arith.constant 16 : i32
    %22 = vector.broadcast %c16_i32_0 : i32 to vector<8x128xi32>
    %23 = arith.shrui %21, %22 : vector<8x128xi32>
    %24 = arith.xori %21, %23 : vector<8x128xi32>
    %c8_i32 = arith.constant 8 : i32
    %25 = vector.broadcast %c8_i32 : i32 to vector<8x128xi32>
    %26 = arith.shrui %24, %25 : vector<8x128xi32>
    %27 = arith.sitofp %26 : vector<8x128xi32> to vector<8x128xf32>
    %cst = arith.constant 5.96046448E-6 : f32
    %28 = vector.broadcast %cst : f32 to vector<8x128xf32>
    %29 = arith.mulf %27, %28 : vector<8x128xf32>
    %30 = arith.fptosi %29 : vector<8x128xf32> to vector<8x128xi32>
    %c1_i32 = arith.constant 1 : i32
    %31 = vector.broadcast %c1_i32 : i32 to vector<8x128xi32>
    %32 = arith.addi %30, %31 : vector<8x128xi32>
    %c100_i32 = arith.constant 100 : i32
    %33 = vector.broadcast %c100_i32 : i32 to vector<8x128xi32>
    %34 = arith.minsi %32, %33 : vector<8x128xi32>
    %c0_1 = arith.constant 0 : index
    %c0_2 = arith.constant 0 : index
    %35 = vector.load %arg2[%c0_1, %c0_2] : memref<8x128xi32, #tpu.memory_space<vmem>>, vector<8x128xi32>
    tpu.vector_store %arg2[%c0_1, %c0_2], %34 {strides = array<i32>} : memref<8x128xi32, #tpu.memory_space<vmem>>, vector<8x128xi32>,
    return
  }
  func.func @transform_0(%arg0: i32) -> i32 {
    %c0_i32 = arith.constant 0 : i32
    %c0_i32_0 = arith.constant 0 : i32
    return %c0_i32 : i32
  }
  func.func @transform_1(%arg0: i32) -> (i32, i32) {
    %c0_i32 = arith.constant 0 : i32
    %c0_i32_0 = arith.constant 0 : i32
    return %arg0, %c0_i32 : i32, i32
  }
}

</mosaic_0001>

<llo_original>
// kernel: tpu_custom_call.1
$region0: #{tpu_custom_call.1}
  #allocation0 [shape = 'u32[]', space=smem, size = 0x4, offset = 0x4, fixed_abs, tag = 'smem constant byte address 0x4 - core index']
  #allocation1 [shape = 'u32[144,128]{1,0:T(1,128)}', space=vmem, size = 0x12000, scoped, tag = 'internal scratch']
  #allocation2 [shape = 's32[1]{0:T(128)S(6)}', space=smem, size = 0x200, scoped, tag = 'scoped memory for tpu_custom_call.1']
  %s0 = inlined_call_operand.<no memory space> [shape: s32[1], index: 0, kind: input, shape index: {}]
  %s1 = inlined_call_operand.hbm [shape: s32[8,128], index: 1, kind: output, shape index: {}]
  %s2 = sld [smem:[#allocation0]]
  $region14: #{tpu_custom_call.1} parent=0
    _
  %s4 = ssub.s32 1, %s2
  %s5 = scalar_select 0, %s4, %s2
  %6 = sst [smem:[#allocation2]] %s0
  $region1: #{tpu_custom_call.1} parent=0
    #allocation3 [shape = 'u8[4096]{0}', space=vmem, size = 0x1000, scoped, tag = 'output window, operand 0, single buffered']
    #allocation4 [shape = 's32[1]{0}', space=sflag, size = 0x4, scoped, tag = 'scoped memory for tpu_custom_call.1']
    %7 = vsyncpa [#allocation4], 0
    // Predicated region
    $region2: #{tpu_custom_call.1} parent=1 // pred_check
      _
    $region3: #{tpu_custom_call.1} parent=1 // pred_check_branch
      %9 = sbr.rel (0) target = $region5
    $region4: #{tpu_custom_call.1} parent=1 // pred_region
      _
    $region5: #{tpu_custom_call.1} parent=1 // pred_fallthru
      _
    %s10 = smul.u32 0, 1024
    %v11 = vlaneseq
    %v12 = vshrl.u32 %v11, 7
    %v13 = vlaneseq
    %v14 = vand.u32 %v13, 127
    %v15 = vmul.u32 %v12, 128
    %v16 = vstv %s10
    %v17 = vadd.s32 %v16, %v15
    %v18 = vadd.s32 %v17, %v14
    %s19 = sld [smem:[#allocation2]]
    %s20 = smul.u32 %s19, 2654435761
    %v21 = vstv %s20
    %v22 = vadd.s32 %v18, %v21
    %v23 = vshrl.u32 %v22, 16
    %v24 = vxor.u32 %v22, %v23
    %v25 = vmul.u32 %v24, 2146121005
    %v26 = vshrl.u32 %v25, 15
    %v27 = vxor.u32 %v25, %v26
    %v28 = vmul.u32 %v27, 2221713035
    %v29 = vshrl.u32 %v28, 16
    %v30 = vxor.u32 %v28, %v29
    %v31 = vshrl.u32 %v30, 8
    %v32 = vcvt.s32.f32 %v31
    %v33 = vmul.f32 %v32, 5.9604645e-06
    %v34 = vcvt.f32.s32.to.zero.pseudo %v33
    %v35 = vadd.s32 %v34, 1
    %vm36 = vcmp.lt.s32.totalorder %v35, 100
    %v37 = vsel %vm36, %v35, 100
    %38 = vst [vmem:[#allocation3] sm:$0xff] %v37
    // Predicated region
    $region6: #{tpu_custom_call.1} parent=1 // pred_check
      _
    $region7: #{tpu_custom_call.1} parent=1 // pred_check_branch
      %40 = sbr.rel (0) target = $region9
    $region8: #{tpu_custom_call.1} parent=1 // pred_region
      %s42 = ssub.s32 128, 128
      %43 = vsyncadd [#allocation4], %s42
      %s45 = sshll.u32 [#allocation3], 4
      %s46 = int_to_ptr.vmem [resolvable:$true] %s45
      %48 = dma.vmem_to_hbm [thread:$0]  %s46, 128, %s1, [#allocation4]
    $region9: #{tpu_custom_call.1} parent=1 // pred_fallthru
      _
    // Predicated region
    $region10: #{tpu_custom_call.1} parent=1 // pred_check
      _
    $region11: #{tpu_custom_call.1} parent=1 // pred_check_branch
      %50 = sbr.rel (0) target = $region13
    $region12: #{tpu_custom_call.1} parent=1 // pred_region
      %51 = dma.done [#allocation4], 128
    $region13: #{tpu_custom_call.1} parent=1 // pred_fallthru
      _
    %52 = vsyncpa [#allocation4], 1

</llo_original>
